<compile_context>
chip_gen: v7x
topology: tpu7x:2x2x1
jax: 0.10.0
libtpu: 0.0.40
codegen_flags: <defaults>
</compile_context>

<pallas_src>
import functools
import math

import jax
import jax.numpy as jnp
from jax import lax
from jax.experimental import pallas as pl
from jax.experimental.pallas import tpu as pltpu


CFG = dict(
    image_size=32, patch=8, n_views=2, cam_dim=16,
    vis_dim=128, vis_layers=2, vis_heads=4, vis_mlp=256,
    vocab=256, hidden=128, layers=2, heads=4, mlp=256,
    rope_theta=10000.0,
)


# ---------------------------------------------------------------------------
# Fused (norm ->) matmul (-> bias -> activation -> residual) kernel
# Grid: (M tiles "parallel", N tiles "arbitrary").  Norm is computed once per
# M-tile (at N-tile 0) and cached in VMEM scratch as bf16.
# ---------------------------------------------------------------------------

def _fused_linear_kernel(*refs, norm, activation, has_bias, has_residual,
                         eps, cache_norm):
    it = iter(refs)
    x_ref = next(it)
    nw_ref = next(it) if norm in ("rms", "ln") else None
    nb_ref = next(it) if norm == "ln" else None
    w_ref = next(it)
    w2_ref = next(it) if activation == "swiglu" else None
    b_ref = next(it) if has_bias else None
    res_ref = next(it) if has_residual else None
    o_ref = next(it)
    xn_ref = next(it) if cache_norm else None

    def _normed_bf16():
        x = x_ref[...].astype(jnp.float32)
        if norm == "rms":
            var = jnp.mean(x * x, axis=-1, keepdims=True)
            x = x * lax.rsqrt(var + eps) * nw_ref[...]
        else:  # "ln"
            mu = jnp.mean(x, axis=-1, keepdims=True)
            var = jnp.mean((x - mu) ** 2, axis=-1, keepdims=True)
            x = (x - mu) * lax.rsqrt(var + eps) * nw_ref[...] + nb_ref[...]
        return x.astype(jnp.bfloat16)

    if norm is None:
        xb = x_ref[...].astype(jnp.bfloat16)
    else:
        @pl.when(pl.program_id(1) == 0)
        def _():
            xn_ref[...] = _normed_bf16()
        xb = xn_ref[...]

    y = jnp.dot(xb, w_ref[...], preferred_element_type=jnp.float32)
    if activation == "swiglu":
        up = jnp.dot(xb, w2_ref[...], preferred_element_type=jnp.float32)
        y = jax.nn.silu(y) * up
    if has_bias:
        y = y + b_ref[...]
    if activation == "gelu":
        y = jax.nn.gelu(y)
    elif activation == "silu":
        y = jax.nn.silu(y)
    if has_residual:
        y = y + res_ref[...].astype(jnp.float32)
    o_ref[...] = y.astype(o_ref.dtype)


def fused_linear(x, w, b=None, *, w2=None, norm=None, norm_w=None, norm_b=None,
                 activation=None, residual=None, out_dtype=None, eps=1e-5):
    """x: (M, K); w (and w2 for swiglu): (K, N) bf16.  Optional pre-norm,
    bias, activation, residual.  swiglu: y = silu(x@w) * (x@w2)."""
    M, K = x.shape
    Kw, N = w.shape
    assert K == Kw
    if activation == "swiglu":
        assert w2 is not None and b is None and residual is None
    if out_dtype is None:
        out_dtype = x.dtype

    tm = M // 2 if (M % 16 == 0) else M            # >=2 parallel M blocks (v7x)
    tn = 128 if (N % 128 == 0 and N > 128) else N  # tile N (incl. swiglu / lm_head)
    grid = (M // tm, N // tn)

    operands = [x]
    in_specs = [pl.BlockSpec((tm, K), lambda i, j: (i, 0))]
    if norm in ("rms", "ln"):
        operands.append(norm_w.reshape(1, K).astype(jnp.float32))
        in_specs.append(pl.BlockSpec((1, K), lambda i, j: (0, 0)))
    if norm == "ln":
        operands.append(norm_b.reshape(1, K).astype(jnp.float32))
        in_specs.append(pl.BlockSpec((1, K), lambda i, j: (0, 0)))
    operands.append(w)
    in_specs.append(pl.BlockSpec((K, tn), lambda i, j: (0, j)))
    if activation == "swiglu":
        operands.append(w2)
        in_specs.append(pl.BlockSpec((K, tn), lambda i, j: (0, j)))
    if b is not None:
        operands.append(b.reshape(1, N).astype(jnp.float32))
        in_specs.append(pl.BlockSpec((1, tn), lambda i, j: (0, j)))
    if residual is not None:
        operands.append(residual)
        in_specs.append(pl.BlockSpec((tm, tn), lambda i, j: (i, j)))

    cache_norm = norm is not None
    scratch = [pltpu.VMEM((tm, K), jnp.bfloat16)] if cache_norm else []

    return pl.pallas_call(
        functools.partial(_fused_linear_kernel, norm=norm, activation=activation,
                          has_bias=b is not None, has_residual=residual is not None,
                          eps=eps, cache_norm=cache_norm),
        out_shape=jax.ShapeDtypeStruct((M, N), out_dtype),
        grid=grid,
        in_specs=in_specs,
        out_specs=pl.BlockSpec((tm, tn), lambda i, j: (i, j)),
        scratch_shapes=scratch,
        # N axis stays "arbitrary" so the norm cache at program_id(1)==0 is
        # valid under megacore splitting; the M axis carries the parallelism.
        compiler_params=pltpu.CompilerParams(
            dimension_semantics=("parallel", "arbitrary")),
    )(*operands)


# ---------------------------------------------------------------------------
# Lane-dense multi-head attention over a fused (B, S, 3D) qkv tensor.
# RoPE (interleaved-pair convention) is applied once per (S, D) q/k via two
# pltpu.roll's + a lane-parity select; heads are static lane slices and each
# head's (S, Dh) output is stored directly into o_ref.
# ---------------------------------------------------------------------------

def _mha_kernel(qkv_ref, *rest, nh, causal, use_rope, bb):
    if use_rope:
        cos_ref, sin_ref, o_ref = rest
    else:
        (o_ref,) = rest
    S = qkv_ref.shape[1]
    D = o_ref.shape[2]
    Dh = D // nh

    if causal:
        row = lax.broadcasted_iota(jnp.int32, (S, S), 0)
        col = lax.broadcasted_iota(jnp.int32, (S, S), 1)
        keep = col <= row
    if use_rope:
        cos = cos_ref[...]                       # (S, D) f32
        sin = sin_ref[...]                       # (S, D) f32, sign pre-folded
        lane = lax.broadcasted_iota(jnp.int32, (S, D), 1)
        even = (lane % 2) == 0

        def _rotate(xf):                         # pair-swap within each head
            return jnp.where(even,
                             pltpu.roll(xf, D - 1, axis=1),   # even lane <- x[l+1]
                             pltpu.roll(xf, 1, axis=1))       # odd  lane <- x[l-1]

    for b in range(bb):                          # static unroll over batch rows
        q = qkv_ref[b, :, 0:D]                   # bf16, 1/sqrt(Dh) folded into W_q
        k = qkv_ref[b, :, D:2 * D]
        v = qkv_ref[b, :, 2 * D:3 * D]
        if use_rope:
            qf = q.astype(jnp.float32)
            kf = k.astype(jnp.float32)
            q = (qf * cos + _rotate(qf) * sin).astype(jnp.bfloat16)
            k = (kf * cos + _rotate(kf) * sin).astype(jnp.bfloat16)
        for h in range(nh):                      # static lane slices, unrolled
            sl = slice(h * Dh, (h + 1) * Dh)
            s = lax.dot_general(q[:, sl], k[:, sl], (((1,), (1,)), ((), ())),
                                preferred_element_type=jnp.float32)   # (S, S)
            if causal:
                s = jnp.where(keep, s, jnp.float32(-1e30))
            m = jnp.max(s, axis=-1, keepdims=True)
            p = jnp.exp(s - m)
            denom = jnp.sum(p, axis=-1, keepdims=True)
            p = p * pl.reciprocal(denom, approx=True)
            o = jnp.dot(p.astype(jnp.bfloat16), v[:, sl],
                        preferred_element_type=jnp.float32)           # (S, Dh)
            o_ref[b, :, h * Dh:(h + 1) * Dh] = o.astype(o_ref.dtype)


def multi_head_attention(qkv, *, nh, causal, cos=None, sin=None):
    """qkv: (B, S, 3D) fused tensor -> (B, S, D)."""
    B, S, D3 = qkv.shape
    D = D3 // 3
    use_rope = cos is not None
    bb = 2 if (B % 2 == 0 and B >= 4) else 1     # amortize per-step overhead
    grid = (B // bb,)
    operands = [qkv]
    in_specs = [pl.BlockSpec((bb, S, D3), lambda b: (b, 0, 0))]
    if use_rope:
        operands += [cos, sin]
        in_specs += [pl.BlockSpec((S, D), lambda b: (0, 0)),
                     pl.BlockSpec((S, D), lambda b: (0, 0))]
    return pl.pallas_call(
        functools.partial(_mha_kernel, nh=nh, causal=causal,
                          use_rope=use_rope, bb=bb),
        out_shape=jax.ShapeDtypeStruct((B, S, D), qkv.dtype),
        grid=grid,
        in_specs=in_specs,
        out_specs=pl.BlockSpec((bb, S, D), lambda b: (b, 0, 0)),
        compiler_params=pltpu.CompilerParams(dimension_semantics=("parallel",)),
    )(*operands)


# ---------------------------------------------------------------------------
# Fused patch embedding: im2col-matmul + bias + (pos_embed + cam) bias +
# pre-LayerNorm, one grid step per view.
# ---------------------------------------------------------------------------

def _patch_embed_kernel(p_ref, w_ref, b_ref, pc_ref, lnw_ref, lnb_ref, o_ref, *, eps):
    x = jnp.dot(p_ref[...], w_ref[...], preferred_element_type=jnp.float32)
    x = x + b_ref[...] + pc_ref[...]
    mu = jnp.mean(x, axis=-1, keepdims=True)
    var = jnp.mean((x - mu) ** 2, axis=-1, keepdims=True)
    y = (x - mu) * lax.rsqrt(var + eps) * lnw_ref[...] + lnb_ref[...]
    o_ref[...] = y.astype(o_ref.dtype)


def patch_embed(patches, w, b, posecam, lnw, lnb, *, n_per_view, eps=1e-5):
    M, CP2 = patches.shape
    Dv = w.shape[1]
    grid = (M // n_per_view,)
    return pl.pallas_call(
        functools.partial(_patch_embed_kernel, eps=eps),
        out_shape=jax.ShapeDtypeStruct((M, Dv), jnp.bfloat16),
        grid=grid,
        in_specs=[pl.BlockSpec((n_per_view, CP2), lambda v: (v, 0)),
                  pl.BlockSpec((CP2, Dv), lambda v: (0, 0)),
                  pl.BlockSpec((1, Dv), lambda v: (0, 0)),
                  pl.BlockSpec((n_per_view, Dv), lambda v: (v, 0)),
                  pl.BlockSpec((1, Dv), lambda v: (0, 0)),
                  pl.BlockSpec((1, Dv), lambda v: (0, 0))],
        out_specs=pl.BlockSpec((n_per_view, Dv), lambda v: (v, 0)),
        compiler_params=pltpu.CompilerParams(dimension_semantics=("parallel",)),
    )(patches, w, b.reshape(1, Dv).astype(jnp.float32), posecam,
      lnw.reshape(1, Dv).astype(jnp.float32), lnb.reshape(1, Dv).astype(jnp.float32))


# ---------------------------------------------------------------------------
# Tiled shifted cross-entropy: parallel M-row tiles, vocab-reduction axis with
# running max / log-sum-exp in VMEM scratch, lane-dense (tm, 128) output.
# ---------------------------------------------------------------------------

def _ce_kernel(logits_ref, labels_ref, out_ref, m_sc, l_sc, t_sc, *, tv):
    j = pl.program_id(1)

    @pl.when(j == 0)
    def _():
        m_sc[...] = jnp.full(m_sc.shape, -1e30, jnp.float32)
        l_sc[...] = jnp.zeros(l_sc.shape, jnp.float32)
        t_sc[...] = jnp.zeros(t_sc.shape, jnp.float32)

    x = logits_ref[...].astype(jnp.float32)                       # (tm, tv)
    lab = labels_ref[...]                                          # (tm, 1)
    col = j * tv + lax.broadcasted_iota(jnp.int32, x.shape, 1)

    m_prev = m_sc[...]
    m_new = jnp.maximum(m_prev, jnp.max(x, axis=-1, keepdims=True))
    l_sc[...] = (l_sc[...] * jnp.exp(m_prev - m_new)
                 + jnp.sum(jnp.exp(x - m_new), axis=-1, keepdims=True))
    m_sc[...] = m_new
    t_sc[...] = t_sc[...] + jnp.sum(jnp.where(col == lab, x, 0.0),
                                    axis=-1, keepdims=True)

    @pl.when(j == pl.num_programs(1) - 1)
    def _():
        valid = (lab != -100).astype(jnp.float32)
        nll = (jnp.log(l_sc[...]) + m_sc[...] - t_sc[...]) * valid
        out_ref[...] = jnp.broadcast_to(nll, out_ref.shape)       # lane-dense store


def cross_entropy(logits2d, labels1d):
    M, V = logits2d.shape
    Mp = ((M + 15) // 16) * 16                    # pad rows so tm splits evenly
    if Mp != M:
        logits2d = jnp.pad(logits2d, ((0, Mp - M), (0, 0)))
        labels1d = jnp.pad(labels1d, (0, Mp - M), constant_values=-100)
    labels2d = labels1d.reshape(Mp, 1).astype(jnp.int32)
    tm = Mp // 2
    tv = 128 if (V % 128 == 0 and V > 128) else V
    nll = pl.pallas_call(
        functools.partial(_ce_kernel, tv=tv),
        out_shape=jax.ShapeDtypeStruct((Mp, 128), jnp.float32),
        grid=(Mp // tm, V // tv),
        in_specs=[pl.BlockSpec((tm, tv), lambda i, j: (i, j)),
                  pl.BlockSpec((tm, 1), lambda i, j: (i, 0))],
        out_specs=pl.BlockSpec((tm, 128), lambda i, j: (i, 0)),
        scratch_shapes=[pltpu.VMEM((tm, 1), jnp.float32),
                        pltpu.VMEM((tm, 1), jnp.float32),
                        pltpu.VMEM((tm, 1), jnp.float32)],
        compiler_params=pltpu.CompilerParams(
            dimension_semantics=("parallel", "arbitrary")),
    )(logits2d, labels2d)
    denom = jnp.maximum(jnp.sum(labels1d != -100).astype(jnp.float32), 1.0)
    return jnp.sum(nll[:, 0]) / denom


# ---------------------------------------------------------------------------
# Parameters (matmul weights bf16; norm params / biases f32; 1/sqrt(Dh) folded
# into the q-columns of qkv weights; LLaMA layers carry no bias)
# ---------------------------------------------------------------------------

def _randn(key, shape, scale=0.02):
    return scale * jax.random.normal(key, shape, dtype=jnp.float32)


def init_params(key, cfg):
    keys = iter(jax.random.split(key, 64))
    nk = lambda: next(keys)
    P, Dv, D = cfg["patch"], cfg["vis_dim"], cfg["hidden"]
    n = (cfg["image_size"] // P) ** 2
    f32, bf16 = jnp.float32, jnp.bfloat16
    vis_scale = 1.0 / math.sqrt(Dv // cfg["vis_heads"])
    lm_scale = 1.0 / math.sqrt(D // cfg["heads"])
    p = {}
    # vision tower (CLIP-like, pre-LN) + camera-pose embedding
    p["patch_w"] = _randn(nk(), (3 * P * P, Dv)).astype(bf16)
    p["patch_b"] = jnp.zeros((Dv,), f32)
    p["cam_w"] = _randn(nk(), (cfg["cam_dim"], Dv)).astype(bf16)
    p["cam_b"] = jnp.zeros((Dv,), f32)
    p["pos_embed"] = _randn(nk(), (1, n, Dv)).astype(bf16)
    p["vis_pre_ln_w"] = jnp.ones((Dv,), f32)
    p["vis_pre_ln_b"] = jnp.zeros((Dv,), f32)
    p["vis_layers"] = []
    for _ in range(cfg["vis_layers"]):
        qkv = _randn(nk(), (Dv, 3 * Dv))
        qkv = qkv.at[:, :Dv].multiply(vis_scale)          # fold 1/sqrt(Dh) into W_q
        p["vis_layers"].append(dict(
            ln1_w=jnp.ones((Dv,), f32), ln1_b=jnp.zeros((Dv,), f32),
            qkv_w=qkv.astype(bf16), qkv_b=jnp.zeros((3 * Dv,), f32),
            o_w=_randn(nk(), (Dv, Dv)).astype(bf16), o_b=jnp.zeros((Dv,), f32),
            ln2_w=jnp.ones((Dv,), f32), ln2_b=jnp.zeros((Dv,), f32),
            fc1_w=_randn(nk(), (Dv, cfg["vis_mlp"])).astype(bf16),
            fc1_b=jnp.zeros((cfg["vis_mlp"],), f32),
            fc2_w=_randn(nk(), (cfg["vis_mlp"], Dv)).astype(bf16),
            fc2_b=jnp.zeros((Dv,), f32)))
    # multimodal projector
    p["proj1_w"] = _randn(nk(), (Dv, D)).astype(bf16)
    p["proj1_b"] = jnp.zeros((D,), f32)
    p["proj2_w"] = _randn(nk(), (D, D)).astype(bf16)
    p["proj2_b"] = jnp.zeros((D,), f32)
    # language model (LLaMA-like, no biases), fused QKV, split gate/up
    p["embed"] = _randn(nk(), (cfg["vocab"], D)).astype(bf16)
    p["lm_layers"] = []
    for _ in range(cfg["layers"]):
        qkv = _randn(nk(), (D, 3 * D))
        qkv = qkv.at[:, :D].multiply(lm_scale)            # fold 1/sqrt(Dh) into W_q
        p["lm_layers"].append(dict(
            in_norm=jnp.ones((D,), f32),
            qkv_w=qkv.astype(bf16),
            o_w=_randn(nk(), (D, D)).astype(bf16),
            post_norm=jnp.ones((D,), f32),
            gate_w=_randn(nk(), (D, cfg["mlp"])).astype(bf16),
            up_w=_randn(nk(), (D, cfg["mlp"])).astype(bf16),
            down_w=_randn(nk(), (cfg["mlp"], D)).astype(bf16)))
    p["final_norm"] = jnp.ones((D,), f32)
    p["lm_head"] = _randn(nk(), (D, cfg["vocab"])).astype(bf16)
    return p


# ---------------------------------------------------------------------------
# Model forward
# ---------------------------------------------------------------------------

def vision_tower(params, cfg, pixel_values, camera_pos):
    """pixel_values: (B*V, 3, H, W); camera_pos: (B*V, cam_dim) -> (B*V, n, Dv)."""
    BV, C, H, W = pixel_values.shape
    P, Dv, nh = cfg["patch"], cfg["vis_dim"], cfg["vis_heads"]
    Hp, Wp = H // P, W // P
    n = Hp * Wp
    # im2col: NCHW -> (BV*n, C*P*P); patch-embed matmul == strided conv
    patches = pixel_values.reshape(BV, C, Hp, P, Wp, P)
    patches = patches.transpose(0, 2, 4, 1, 3, 5).reshape(BV * n, C * P * P)
    patches = patches.astype(jnp.bfloat16)
    # tiny (BV, cam_dim)@(cam_dim, Dv) camera projection stays in XLA: a
    # pallas_call's launch overhead would dwarf the compute at M=4 rows.
    cam = camera_pos @ params["cam_w"].astype(jnp.float32) + params["cam_b"]
    posecam = (params["pos_embed"].astype(jnp.float32)
               + cam[:, None, :]).reshape(BV * n, Dv)
    x = patch_embed(patches, params["patch_w"], params["patch_b"], posecam,
                    params["vis_pre_ln_w"], params["vis_pre_ln_b"], n_per_view=n)

    for l in params["vis_layers"]:
        qkv = fused_linear(x, l["qkv_w"], l["qkv_b"], norm="ln",
                           norm_w=l["ln1_w"], norm_b=l["ln1_b"])       # (BV*n, 3Dv)
        attn = multi_head_attention(qkv.reshape(BV, n, 3 * Dv),
                                    nh=nh, causal=False)               # (BV, n, Dv)
        x = fused_linear(attn.reshape(BV * n, Dv), l["o_w"], l["o_b"], residual=x)
        h = fused_linear(x, l["fc1_w"], l["fc1_b"], norm="ln",
                         norm_w=l["ln2_w"], norm_b=l["ln2_b"], activation="gelu")
        x = fused_linear(h, l["fc2_w"], l["fc2_b"], residual=x)
    return x.reshape(BV, n, Dv)


def projector(params, feats):
    BV, n, Dv = feats.shape
    h = fused_linear(feats.reshape(BV * n, Dv), params["proj1_w"],
                     params["proj1_b"], activation="gelu")
    return fused_linear(h, params["proj2_w"], params["proj2_b"])       # (BV*n, D)


def rope_tables_full(S, D, nh, theta):
    """Lane-dense (S, D) cos and signed-sin tables (interleaved-pair RoPE),
    tiled per head, so the kernel rotates the full (S, D) q/k in one shot."""
    Dh = D // nh
    half = Dh // 2
    inv = 1.0 / (theta ** (jnp.arange(half, dtype=jnp.float32) / half))
    freqs = jnp.outer(jnp.arange(S, dtype=jnp.float32), inv)           # (S, half)
    freqs = jnp.repeat(freqs, 2, axis=-1)                               # (S, Dh)
    cos = jnp.tile(jnp.cos(freqs), (1, nh))                             # (S, D)
    sin = jnp.tile(jnp.sin(freqs), (1, nh))
    sign = jnp.tile(jnp.array([-1.0, 1.0], jnp.float32), (D // 2,))     # -sin even, +sin odd
    return cos, sin * sign[None, :]


def language_model(params, cfg, inputs_embeds):
    B, S, D = inputs_embeds.shape
    nh = cfg["heads"]
    cos, sin = rope_tables_full(S, D, nh, cfg["rope_theta"])
    hidden_states = [inputs_embeds]
    x = inputs_embeds.reshape(B * S, D)
    for l in params["lm_layers"]:
        qkv = fused_linear(x, l["qkv_w"], norm="rms", norm_w=l["in_norm"])   # (B*S, 3D)
        attn = multi_head_attention(qkv.reshape(B, S, 3 * D), nh=nh,
                                    causal=True, cos=cos, sin=sin)           # (B, S, D)
        x = fused_linear(attn.reshape(B * S, D), l["o_w"], residual=x)
        h = fused_linear(x, l["gate_w"], w2=l["up_w"], norm="rms",
                         norm_w=l["post_norm"], activation="swiglu")         # (B*S, mlp)
        x = fused_linear(h, l["down_w"], residual=x)
        hidden_states.append(x.reshape(B, S, D))
    logits = fused_linear(x, params["lm_head"], norm="rms",
                          norm_w=params["final_norm"],
                          out_dtype=jnp.float32).reshape(B, S, cfg["vocab"])
    return logits, hidden_states


def llava3d_forward(params, cfg, input_ids, pixel_values, camera_pos,
                    attention_mask=None, labels=None):
    """Equivalent of Llava3DModelInterface.forward (output_hidden_states=True)."""
    # TODO(synk): attention_mask padding is not applied inside the attention
    # kernel (sequences are assumed dense); only causal masking is used.
    tok_embeds = jnp.take(params["embed"], input_ids, axis=0)       # (B, T, D) bf16
    B = input_ids.shape[0]
    if pixel_values is not None:
        nV = pixel_values.shape[1]
        pv = pixel_values.reshape((B * nV,) + pixel_values.shape[2:])
        cam = camera_pos.reshape(B * nV, -1)
        feats = vision_tower(params, cfg, pv.astype(jnp.float32), cam)   # (B*nV, n, Dv)
        n = feats.shape[1]
        img_embeds = projector(params, feats).reshape(B, nV * n, -1)     # (B, nV*n, D)
        inputs_embeds = jnp.concatenate([img_embeds, tok_embeds], axis=1)
    else:
        inputs_embeds = tok_embeds
    logits, hidden_states = language_model(params, cfg, inputs_embeds)
    out = {"logits": logits, "hidden_states": hidden_states}
    if labels is not None:
        Bv, S, Vc = logits.shape
        shift_logits = logits[:, :-1, :].reshape(Bv * (S - 1), Vc)
        shift_labels = labels[:, 1:].reshape(-1)
        out["loss"] = cross_entropy(shift_logits, shift_labels)
    return out


# ---------------------------------------------------------------------------
# Driver
# ---------------------------------------------------------------------------

if __name__ == "__main__":
    cfg = CFG
    key = jax.random.PRNGKey(0)
    kp, ki, kv, kc, kl = jax.random.split(key, 5)
    params = init_params(kp, cfg)

    B, T, nV = 2, 8, cfg["n_views"]
    n_per_view = (cfg["image_size"] // cfg["patch"]) ** 2            # 16
    n_img = nV * n_per_view                                          # 32 image tokens
    input_ids = jax.random.randint(ki, (B, T), 0, cfg["vocab"], dtype=jnp.int32)
    pixel_values = jax.random.normal(
        kv, (B, nV, 3, cfg["image_size"], cfg["image_size"]), dtype=jnp.float32)
    camera_pos = jax.random.normal(kc, (B, nV, cfg["cam_dim"]), dtype=jnp.float32)
    attention_mask = jnp.ones((B, n_img + T), dtype=jnp.int32)
    text_labels = jax.random.randint(kl, (B, T), 0, cfg["vocab"], dtype=jnp.int32)
    labels = jnp.concatenate(
        [jnp.full((B, n_img), -100, dtype=jnp.int32), text_labels], axis=1)

    out = llava3d_forward(params, cfg, input_ids, pixel_values, camera_pos,
                          attention_mask=attention_mask, labels=labels)
    jax.block_until_ready(out["logits"])
    jax.block_until_ready(out["loss"])
    assert out["logits"].shape == (B, n_img + T, cfg["vocab"])
    assert len(out["hidden_states"]) == cfg["layers"] + 1
    assert bool(jnp.isfinite(out["loss"]))
    print("KERNEL_OK")
</pallas_src>

<mosaic_0001>
module attributes {stable_mosaic.version = 11 : i64} {
  func.func @_patch_embed_kernel(%arg0: i32, %arg1: memref<16x192xbf16, #tpu.memory_space<vmem>>, %arg2: memref<192x128xbf16, #tpu.memory_space<vmem>>, %arg3: memref<1x128xf32, #tpu.memory_space<vmem>>, %arg4: memref<16x128xf32, #tpu.memory_space<vmem>>, %arg5: memref<1x128xf32, #tpu.memory_space<vmem>>, %arg6: memref<1x128xf32, #tpu.memory_space<vmem>>, %arg7: memref<16x128xbf16, #tpu.memory_space<vmem>>) attributes {dimension_semantics = [#tpu.dimension_semantics<parallel>], iteration_bounds = array<i64: 4>, scalar_prefetch = 0 : i64, scratch_operands = 0 : i64, tpu.core_type = #tpu.core_type<tc>, window_params = [{transform_indices = @transform_0, window_bounds = array<i64: 16, 192>}, {pipeline_mode = #tpu.pipeline_mode<synchronous>, transform_indices = @transform_1, window_bounds = array<i64: 192, 128>}, {pipeline_mode = #tpu.pipeline_mode<synchronous>, transform_indices = @transform_2, window_bounds = array<i64: 1, 128>}, {transform_indices = @transform_3, window_bounds = array<i64: 16, 128>}, {pipeline_mode = #tpu.pipeline_mode<synchronous>, transform_indices = @transform_4, window_bounds = array<i64: 1, 128>}, {pipeline_mode = #tpu.pipeline_mode<synchronous>, transform_indices = @transform_5, window_bounds = array<i64: 1, 128>}, {transform_indices = @transform_6, window_bounds = array<i64: 16, 128>}]} {
    %c0 = arith.constant 0 : index
    %c0_0 = arith.constant 0 : index
    %0 = vector.load %arg1[%c0, %c0_0] : memref<16x192xbf16, #tpu.memory_space<vmem>>, vector<16x192xbf16>
    %c0_1 = arith.constant 0 : index
    %c0_2 = arith.constant 0 : index
    %1 = vector.load %arg2[%c0_1, %c0_2] : memref<192x128xbf16, #tpu.memory_space<vmem>>, vector<192x128xbf16>
    %cst = arith.constant dense<0.000000e+00> : vector<16x128xf32>
    %2 = tpu.matmul %0, %1, %cst {dimension_numbers = #tpu.dot_dimension_numbers<[1], [0], [0], [1], [0, 0, 1, 1], [], []>} : vector<16x192xbf16>, vector<192x128xbf16>, vector<16x128xf32> -> vector<16x128xf32>
    %c0_3 = arith.constant 0 : index
    %c0_4 = arith.constant 0 : index
    %3 = vector.load %arg3[%c0_3, %c0_4] : memref<1x128xf32, #tpu.memory_space<vmem>>, vector<1x128xf32>
    %4 = vector.broadcast %3 : vector<1x128xf32> to vector<16x128xf32>
    %5 = arith.addf %2, %4 : vector<16x128xf32>
    %c0_5 = arith.constant 0 : index
    %c0_6 = arith.constant 0 : index
    %6 = vector.load %arg4[%c0_5, %c0_6] : memref<16x128xf32, #tpu.memory_space<vmem>>, vector<16x128xf32>
    %7 = arith.addf %5, %6 : vector<16x128xf32>
    %cst_7 = arith.constant dense<0.000000e+00> : vector<16xf32>
    %8 = vector.multi_reduction <add>, %7, %cst_7 [1] : vector<16x128xf32> to vector<16xf32>
    %9 = vector.shape_cast %8 : vector<16xf32> to vector<16x1xf32>
    %cst_8 = arith.constant 1.280000e+02 : f32
    %10 = vector.broadcast %cst_8 : f32 to vector<16x1xf32>
    %11 = arith.divf %9, %10 : vector<16x1xf32>
    %12 = vector.broadcast %11 : vector<16x1xf32> to vector<16x128xf32>
    %13 = arith.subf %7, %12 : vector<16x128xf32>
    %14 = arith.mulf %13, %13 : vector<16x128xf32>
    %cst_9 = arith.constant dense<0.000000e+00> : vector<16xf32>
    %15 = vector.multi_reduction <add>, %14, %cst_9 [1] : vector<16x128xf32> to vector<16xf32>
    %16 = vector.shape_cast %15 : vector<16xf32> to vector<16x1xf32>
    %cst_10 = arith.constant 1.280000e+02 : f32
    %17 = vector.broadcast %cst_10 : f32 to vector<16x1xf32>
    %18 = arith.divf %16, %17 : vector<16x1xf32>
    %19 = vector.broadcast %11 : vector<16x1xf32> to vector<16x128xf32>
    %20 = arith.subf %7, %19 : vector<16x128xf32>
    %cst_11 = arith.constant 9.99999974E-6 : f32
    %21 = vector.broadcast %cst_11 : f32 to vector<16x1xf32>
    %22 = arith.addf %18, %21 : vector<16x1xf32>
    %23 = math.rsqrt %22 : vector<16x1xf32>
    %24 = vector.broadcast %23 : vector<16x1xf32> to vector<16x128xf32>
    %25 = arith.mulf %20, %24 : vector<16x128xf32>
    %c0_12 = arith.constant 0 : index
    %c0_13 = arith.constant 0 : index
    %26 = vector.load %arg5[%c0_12, %c0_13] : memref<1x128xf32, #tpu.memory_space<vmem>>, vector<1x128xf32>
    %27 = vector.broadcast %26 : vector<1x128xf32> to vector<16x128xf32>
    %28 = arith.mulf %25, %27 : vector<16x128xf32>
    %c0_14 = arith.constant 0 : index
    %c0_15 = arith.constant 0 : index
    %29 = vector.load %arg6[%c0_14, %c0_15] : memref<1x128xf32, #tpu.memory_space<vmem>>, vector<1x128xf32>
    %30 = vector.broadcast %29 : vector<1x128xf32> to vector<16x128xf32>
    %31 = arith.addf %28, %30 : vector<16x128xf32>
    %32 = arith.truncf %31 : vector<16x128xf32> to vector<16x128xbf16>
    %c0_16 = arith.constant 0 : index
    %c0_17 = arith.constant 0 : index
    %33 = vector.load %arg7[%c0_16, %c0_17] : memref<16x128xbf16, #tpu.memory_space<vmem>>, vector<16x128xbf16>
    tpu.vector_store %arg7[%c0_16, %c0_17], %32 {strides = array<i32>} : memref<16x128xbf16, #tpu.memory_space<vmem>>, vector<16x128xbf16>,
    return
  }
  func.func @transform_0(%arg0: i32) -> (i32, i32) {
    %c0_i32 = arith.constant 0 : i32
    %c0_i32_0 = arith.constant 0 : i32
    return %arg0, %c0_i32 : i32, i32
  }
  func.func @transform_1(%arg0: i32) -> (i32, i32) {
    %c0_i32 = arith.constant 0 : i32
    %c0_i32_0 = arith.constant 0 : i32
    %c0_i32_1 = arith.constant 0 : i32
    return %c0_i32, %c0_i32_0 : i32, i32
  }
  func.func @transform_2(%arg0: i32) -> (i32, i32) {
    %c0_i32 = arith.constant 0 : i32
    %c0_i32_0 = arith.constant 0 : i32
    %c0_i32_1 = arith.constant 0 : i32
    return %c0_i32, %c0_i32_0 : i32, i32
  }
  func.func @transform_3(%arg0: i32) -> (i32, i32) {
    %c0_i32 = arith.constant 0 : i32
    %c0_i32_0 = arith.constant 0 : i32
    return %arg0, %c0_i32 : i32, i32
  }
  func.func @transform_4(%arg0: i32) -> (i32, i32) {
    %c0_i32 = arith.constant 0 : i32
    %c0_i32_0 = arith.constant 0 : i32
    %c0_i32_1 = arith.constant 0 : i32
    return %c0_i32, %c0_i32_0 : i32, i32
  }
  func.func @transform_5(%arg0: i32) -> (i32, i32) {
    %c0_i32 = arith.constant 0 : i32
    %c0_i32_0 = arith.constant 0 : i32
    %c0_i32_1 = arith.constant 0 : i32
    return %c0_i32, %c0_i32_0 : i32, i32
  }
  func.func @transform_6(%arg0: i32) -> (i32, i32) {
    %c0_i32 = arith.constant 0 : i32
    %c0_i32_0 = arith.constant 0 : i32
    return %arg0, %c0_i32 : i32, i32
  }
}

</mosaic_0001>

<llo_original>
// kernel: tpu_custom_call.1
$region0: #{tpu_custom_call.1}
  #allocation0 [shape = 'u32[]', space=smem, size = 0x4, offset = 0x4, fixed_abs, tag = 'smem constant byte address 0x4 - core index']
  #allocation1 [shape = 'u32[144,128]{1,0:T(1,128)}', space=vmem, size = 0x12000, scoped, tag = 'internal scratch']
  %s0 = inlined_call_operand.hbm [shape: bf16[64,192], index: 0, kind: input, shape index: {}]
  %s1 = inlined_call_operand.hbm [shape: bf16[192,128], index: 1, kind: input, shape index: {}]
  %s2 = inlined_call_operand.vmem [shape: f32[1,128], index: 2, kind: input, shape index: {}]
  %s3 = inlined_call_operand.hbm [shape: f32[64,128], index: 3, kind: input, shape index: {}]
  %s4 = inlined_call_operand.vmem [shape: f32[1,128], index: 4, kind: input, shape index: {}]
  %s5 = inlined_call_operand.vmem [shape: f32[1,128], index: 5, kind: input, shape index: {}]
  %s6 = inlined_call_operand.hbm [shape: bf16[64,128], index: 6, kind: output, shape index: {}]
  %s7 = sld [smem:[#allocation0]]
  $region69: #{tpu_custom_call.1} parent=0
    _
  %s9 = ssub.s32 1, %s7
  %s10 = scalar_select 0, %s9, %s7
  $region1: #{tpu_custom_call.1} parent=0
    #allocation2 [shape = 'u8[16384]{0}', space=vmem, size = 0x4000, scoped, tag = 'input window, operand 0']
    #allocation3 [shape = 's32[2]{0}', space=sflag, size = 0x8, scoped, tag = 'scoped memory for tpu_custom_call.1']
    #allocation4 [shape = 's32[2]{0}', space=sflag, size = 0x8, scoped, tag = 'scoped memory for tpu_custom_call.1']
    #allocation5 [shape = 'u8[49152]{0}', space=vmem, size = 0xc000, scoped, tag = 'input window, operand 1, single buffered']
    #allocation6 [shape = 's32[1]{0}', space=sflag, size = 0x4, scoped, tag = 'scoped memory for tpu_custom_call.1']
    #allocation7 [shape = 'u8[16384]{0}', space=vmem, size = 0x4000, scoped, tag = 'input window, operand 3']
    #allocation8 [shape = 'u8[8192]{0}', space=vmem, size = 0x2000, scoped, tag = 'output window, operand 0']
    %11 = vsyncpa [#allocation3], 0
    %s12 = scalar_lea.sflag [#allocation3], 1
    %13 = vsyncpa %s12, 0
    %14 = vsyncpa [#allocation6], 0
    %15 = vsyncpa [#allocation4], 0
    %s16 = scalar_lea.sflag [#allocation4], 1
    %17 = vsyncpa %s16, 0
    loop: start=0, step=1, limit=6
    $region2: #{tpu_custom_call.1} parent=1 // loop_pre_header
      _
    $region3: #{tpu_custom_call.1} parent=1 // loop_header
      %s19 = sphi 0, %s23
      %p20 = scmp.ge.s32.totalorder %s19, 6
      %s29 = sphi 0, %s31
      %s32 = sphi 0, %s29
      %s33 = sphi 0, %s32
      %s49 = sphi 0, %s33
      %s53 = sphi 0, %s53
      %s55 = sphi 0, %s53
      %s56 = sphi 0, %s55
      %s70 = sphi 0, %s56
      %s74 = sphi 0, %s74
      %s76 = sphi 0, %s74
      %s77 = sphi 0, %s76
      %s91 = sphi 0, %s77
      %s97 = sphi 0, %s99
      %s100 = sphi 0, %s97
      %s101 = sphi 0, %s100
      %s117 = sphi 0, %s101
      %s121 = sphi 0, %s121
      %s123 = sphi 0, %s121
      %s124 = sphi 0, %s123
      %s138 = sphi 0, %s124
      %s142 = sphi 0, %s142
      %s144 = sphi 0, %s142
      %s145 = sphi 0, %s144
      %s159 = sphi 0, %s145
      %s165 = sphi 0, %s167
      %s168 = sphi 0, %s165
      %s169 = sphi 0, %s168
      %s185 = sphi 0, %s169
    $region4: #{tpu_custom_call.1} parent=1 // loop_header_branch
      %22 = sbr.rel (%p20) target = $region8
    $region5: #{tpu_custom_call.1} parent=1 // loop_body
      %s24 = ssub.s32 %s19, 1
      %s25 = ssub.s32 %s19, 2
      %s26 = sadd.s32 %s19, 1
      %s27 = ssub.s32 %s19, %s26
      %p28 = scmp.eq.s32.totalorder %s27, 0
      %s30 = sadd.s32 %s29, 1
      %s31 = scalar_select %p28, %s29, %s30
      %p34 = pneg %p28
      %p35 = scmp.eq.s32.totalorder %s19, 3
      %p36 = por %p34, %p35
      %p37 = scmp.ne.s32.totalorder %s29, %s32
      %p38 = scmp.eq.s32.totalorder %s19, 0
      %p39 = por %p37, %p38
      %p40 = scmp.ne.s32.totalorder %s29, %s32
      %p41 = scmp.eq.s32.totalorder %s24, 3
      %p42 = por %p40, %p41
      %p43 = scmp.ne.s32.totalorder %s32, %s33
      %p44 = scmp.eq.s32.totalorder %s24, 0
      %p45 = por %p43, %p44
      %p46 = scmp.ne.s32.totalorder %s32, %s33
      %p47 = scmp.eq.s32.totalorder %s25, 3
      %p48 = por %p46, %p47
      %p50 = scmp.ne.s32.totalorder %s33, %s49
      %p51 = scmp.eq.s32.totalorder %s25, 0
      %p52 = por %p50, %p51
      %s54 = sadd.s32 %s53, 1
      %p57 = scmp.eq.s32.totalorder %s19, 3
      %p58 = scmp.ne.s32.totalorder %s53, %s55
      %p59 = scmp.eq.s32.totalorder %s19, 0
      %p60 = por %p58, %p59
      %p61 = scmp.ne.s32.totalorder %s53, %s55
      %p62 = scmp.eq.s32.totalorder %s24, 3
      %p63 = por %p61, %p62
      %p64 = scmp.ne.s32.totalorder %s55, %s56
      %p65 = scmp.eq.s32.totalorder %s24, 0
      %p66 = por %p64, %p65
      %p67 = scmp.ne.s32.totalorder %s55, %s56
      %p68 = scmp.eq.s32.totalorder %s25, 3
      %p69 = por %p67, %p68
      %p71 = scmp.ne.s32.totalorder %s56, %s70
      %p72 = scmp.eq.s32.totalorder %s25, 0
      %p73 = por %p71, %p72
      %s75 = sadd.s32 %s74, 1
      %p78 = scmp.eq.s32.totalorder %s19, 3
      %p79 = scmp.ne.s32.totalorder %s74, %s76
      %p80 = scmp.eq.s32.totalorder %s19, 0
      %p81 = por %p79, %p80
      %p82 = scmp.ne.s32.totalorder %s74, %s76
      %p83 = scmp.eq.s32.totalorder %s24, 3
      %p84 = por %p82, %p83
      %p85 = scmp.ne.s32.totalorder %s76, %s77
      %p86 = scmp.eq.s32.totalorder %s24, 0
      %p87 = por %p85, %p86
      %p88 = scmp.ne.s32.totalorder %s76, %s77
      %p89 = scmp.eq.s32.totalorder %s25, 3
      %p90 = por %p88, %p89
      %p92 = scmp.ne.s32.totalorder %s77, %s91
      %p93 = scmp.eq.s32.totalorder %s25, 0
      %p94 = por %p92, %p93
      %s95 = ssub.s32 %s19, %s26
      %p96 = scmp.eq.s32.totalorder %s95, 0
      %s98 = sadd.s32 %s97, 1
      %s99 = scalar_select %p96, %s97, %s98
      %p102 = pneg %p96
      %p103 = scmp.eq.s32.totalorder %s19, 3
      %p104 = por %p102, %p103
      %p105 = scmp.ne.s32.totalorder %s97, %s100
      %p106 = scmp.eq.s32.totalorder %s19, 0
      %p107 = por %p105, %p106
      %p108 = scmp.ne.s32.totalorder %s97, %s100
      %p109 = scmp.eq.s32.totalorder %s24, 3
      %p110 = por %p108, %p109
      %p111 = scmp.ne.s32.totalorder %s100, %s101
      %p112 = scmp.eq.s32.totalorder %s24, 0
      %p113 = por %p111, %p112
      %p114 = scmp.ne.s32.totalorder %s100, %s101
      %p115 = scmp.eq.s32.totalorder %s25, 3
      %p116 = por %p114, %p115
      %p118 = scmp.ne.s32.totalorder %s101, %s117
      %p119 = scmp.eq.s32.totalorder %s25, 0
      %p120 = por %p118, %p119
      %s122 = sadd.s32 %s121, 1
      %p125 = scmp.eq.s32.totalorder %s19, 3
      %p126 = scmp.ne.s32.totalorder %s121, %s123
      %p127 = scmp.eq.s32.totalorder %s19, 0
      %p128 = por %p126, %p127
      %p129 = scmp.ne.s32.totalorder %s121, %s123
      %p130 = scmp.eq.s32.totalorder %s24, 3
      %p131 = por %p129, %p130
      %p132 = scmp.ne.s32.totalorder %s123, %s124
      %p133 = scmp.eq.s32.totalorder %s24, 0
      %p134 = por %p132, %p133
      %p135 = scmp.ne.s32.totalorder %s123, %s124
      %p136 = scmp.eq.s32.totalorder %s25, 3
      %p137 = por %p135, %p136
      %p139 = scmp.ne.s32.totalorder %s124, %s138
      %p140 = scmp.eq.s32.totalorder %s25, 0
      %p141 = por %p139, %p140
      %s143 = sadd.s32 %s142, 1
      %p146 = scmp.eq.s32.totalorder %s19, 3
      %p147 = scmp.ne.s32.totalorder %s142, %s144
      %p148 = scmp.eq.s32.totalorder %s19, 0
      %p149 = por %p147, %p148
      %p150 = scmp.ne.s32.totalorder %s142, %s144
      %p151 = scmp.eq.s32.totalorder %s24, 3
      %p152 = por %p150, %p151
      %p153 = scmp.ne.s32.totalorder %s144, %s145
      %p154 = scmp.eq.s32.totalorder %s24, 0
      %p155 = por %p153, %p154
      %p156 = scmp.ne.s32.totalorder %s144, %s145
      %p157 = scmp.eq.s32.totalorder %s25, 3
      %p158 = por %p156, %p157
      %p160 = scmp.ne.s32.totalorder %s145, %s159
      %p161 = scmp.eq.s32.totalorder %s25, 0
      %p162 = por %p160, %p161
      %s163 = ssub.s32 %s19, %s26
      %p164 = scmp.eq.s32.totalorder %s163, 0
      %s166 = sadd.s32 %s165, 1
      %s167 = scalar_select %p164, %s165, %s166
      %p170 = pneg %p164
      %p171 = scmp.eq.s32.totalorder %s19, 3
      %p172 = por %p170, %p171
      %p173 = scmp.ne.s32.totalorder %s165, %s168
      %p174 = scmp.eq.s32.totalorder %s19, 0
      %p175 = por %p173, %p174
      %p176 = scmp.ne.s32.totalorder %s165, %s168
      %p177 = scmp.eq.s32.totalorder %s24, 3
      %p178 = por %p176, %p177
      %p179 = scmp.ne.s32.totalorder %s168, %s169
      %p180 = scmp.eq.s32.totalorder %s24, 0
      %p181 = por %p179, %p180
      %p182 = scmp.ne.s32.totalorder %s168, %s169
      %p183 = scmp.eq.s32.totalorder %s25, 3
      %p184 = por %p182, %p183
      %p186 = scmp.ne.s32.totalorder %s169, %s185
      %p187 = scmp.eq.s32.totalorder %s25, 0
      %p188 = por %p186, %p187
      %p189 = scmp.le.s32.totalorder 1, %s19
      %p190 = scmp.lt.s32.totalorder %s19, 5
      %p191 = pnand %p189, %p190
      %p192 = pneg %p191
      // Predicated region
      $region9: #{tpu_custom_call.1} parent=5 // pred_check
        _
      $region10: #{tpu_custom_call.1} parent=5 // pred_check_branch
        %194 = sbr.rel (%p191) target = $region12
      $region11: #{tpu_custom_call.1} parent=5 // pred_region
        %s195 = ssub.s32 %s19, 1
        // Predicated region
        $region13: #{tpu_custom_call.1} parent=11 // pred_check
          %p196 = pneg %p66
        $region14: #{tpu_custom_call.1} parent=11 // pred_check_branch
          %198 = sbr.rel (%p196) target = $region16
        $region15: #{tpu_custom_call.1} parent=11 // pred_region
          %s200 = ssub.s32 1536, 1536
          %201 = vsyncadd [#allocation6], %s200
          %s202 = sshll.u32 [#allocation5], 4
          %s203 = int_to_ptr.vmem [resolvable:$true] %s202
          %208 = dma.hbm_to_vmem [thread:$0]  %s1, 1536, %s203, [#allocation6], 64, 64, 4
        $region16: #{tpu_custom_call.1} parent=11 // pred_fallthru
          _
        // Predicated region
        $region17: #{tpu_custom_call.1} parent=11 // pred_check
          %p209 = pneg %p87
        $region18: #{tpu_custom_call.1} parent=11 // pred_check_branch
          %211 = sbr.rel (%p209) target = $region20
        $region19: #{tpu_custom_call.1} parent=11 // pred_region
          _
        $region20: #{tpu_custom_call.1} parent=11 // pred_fallthru
          _
        // Predicated region
        $region21: #{tpu_custom_call.1} parent=11 // pred_check
          %p212 = pneg %p134
        $region22: #{tpu_custom_call.1} parent=11 // pred_check_branch
          %214 = sbr.rel (%p212) target = $region24
        $region23: #{tpu_custom_call.1} parent=11 // pred_region
          _
        $region24: #{tpu_custom_call.1} parent=11 // pred_fallthru
          _
        // Predicated region
        $region25: #{tpu_custom_call.1} parent=11 // pred_check
          %p215 = pneg %p155
        $region26: #{tpu_custom_call.1} parent=11 // pred_check_branch
          %217 = sbr.rel (%p215) target = $region28
        $region27: #{tpu_custom_call.1} parent=11 // pred_region
          _
        $region28: #{tpu_custom_call.1} parent=11 // pred_fallthru
          _
      $region12: #{tpu_custom_call.1} parent=5 // pred_fallthru
        _
      %p218 = scmp.lt.s32.totalorder %s19, 4
      // Predicated region
      $region29: #{tpu_custom_call.1} parent=5 // pred_check
        %p219 = pneg %p218
      $region30: #{tpu_custom_call.1} parent=5 // pred_check_branch
        %221 = sbr.rel (%p219) target = $region32
      $region31: #{tpu_custom_call.1} parent=5 // pred_region
        // Predicated region
        $region33: #{tpu_custom_call.1} parent=31 // pred_check
          %p222 = pneg %p39
        $region34: #{tpu_custom_call.1} parent=31 // pred_check_branch
          %224 = sbr.rel (%p222) target = $region36
        $region35: #{tpu_custom_call.1} parent=31 // pred_region
          %s225 = sand.u32 %s19, 1
          %s226 = scalar_lea.sflag [#allocation3], %s225
          %s227 = sand.u32 %s29, 1
          %s228 = smul.addr %s227, 16
          %s229 = scalar_lea.vmem [#allocation2], %s228
          %s230 = smul.u32 2, %s19
          %s232 = ssub.s32 256, 256
          %233 = vsyncadd %s226, %s232
          %s234 = smul.addr %s230, 2
          %s235 = smul.addr %s234, 64
          %s236 = scalar_lea.hbm %s0, %s235
          %s237 = sshll.u32 %s229, 4
          %s238 = int_to_ptr.vmem [resolvable:$true] %s237
          %243 = dma.hbm_to_vmem [thread:$0]  %s236, 256, %s238, %s226, 128, 128, 8
        $region36: #{tpu_custom_call.1} parent=31 // pred_fallthru
          _
        // Predicated region
        $region37: #{tpu_custom_call.1} parent=31 // pred_check
          %p244 = pneg %p107
        $region38: #{tpu_custom_call.1} parent=31 // pred_check_branch
          %246 = sbr.rel (%p244) target = $region40
        $region39: #{tpu_custom_call.1} parent=31 // pred_region
          %s247 = sand.u32 %s19, 1
          %s248 = scalar_lea.sflag [#allocation3], %s247
          %s249 = sand.u32 %s97, 1
          %s250 = smul.addr %s249, 16
          %s251 = scalar_lea.vmem [#allocation7], %s250
          %s252 = smul.u32 2, %s19
          %s254 = ssub.s32 256, 256
          %255 = vsyncadd %s248, %s254
          %s256 = smul.addr %s252, 128
          %s257 = scalar_lea.hbm %s3, %s256
          %s258 = sshll.u32 %s251, 4
          %s259 = int_to_ptr.vmem [resolvable:$true] %s258
          %264 = dma.hbm_to_vmem [thread:$0]  %s257, 256, %s259, %s248, 128, 128, 8
        $region40: #{tpu_custom_call.1} parent=31 // pred_fallthru
          _
      $region32: #{tpu_custom_call.1} parent=5 // pred_fallthru
        _
      %p265 = scmp.le.s32.totalorder 1, %s19
      %p266 = scmp.lt.s32.totalorder %s19, 5
      %p267 = pnand %p265, %p266
      %p268 = pneg %p267
      // Predicated region
      $region41: #{tpu_custom_call.1} parent=5 // pred_check
        _
      $region42: #{tpu_custom_call.1} parent=5 // pred_check_branch
        %270 = sbr.rel (%p267) target = $region44
      $region43: #{tpu_custom_call.1} parent=5 // pred_region
        %s271 = ssub.s32 %s19, 1
        %s272 = sand.u32 %s24, 1
        %s273 = scalar_lea.sflag [#allocation3], %s272
        %s274 = sand.u32 %s32, 1
        %s275 = smul.addr %s274, 16
        %s276 = scalar_lea.vmem [#allocation2], %s275
        // Predicated region
        $region45: #{tpu_custom_call.1} parent=43 // pred_check
          %p277 = pneg %p45
        $region46: #{tpu_custom_call.1} parent=43 // pred_check_branch
          %279 = sbr.rel (%p277) target = $region48
        $region47: #{tpu_custom_call.1} parent=43 // pred_region
          %280 = dma.done %s273, 256
        $region48: #{tpu_custom_call.1} parent=43 // pred_fallthru
          _
        // Predicated region
        $region49: #{tpu_custom_call.1} parent=43 // pred_check
          %p281 = pneg %p66
        $region50: #{tpu_custom_call.1} parent=43 // pred_check_branch
          %283 = sbr.rel (%p281) target = $region52
        $region51: #{tpu_custom_call.1} parent=43 // pred_region
          %284 = dma.done [#allocation6], 1536
        $region52: #{tpu_custom_call.1} parent=43 // pred_fallthru
          _
        %s285 = sand.u32 %s24, 1
        %s286 = scalar_lea.sflag [#allocation3], %s285
        %s287 = sand.u32 %s100, 1
        %s288 = smul.addr %s287, 16
        %s289 = scalar_lea.vmem [#allocation7], %s288
        // Predicated region
        $region53: #{tpu_custom_call.1} parent=43 // pred_check
          %p290 = pneg %p113
        $region54: #{tpu_custom_call.1} parent=43 // pred_check_branch
          %292 = sbr.rel (%p290) target = $region56
        $region55: #{tpu_custom_call.1} parent=43 // pred_region
          %293 = dma.done %s286, 256
        $region56: #{tpu_custom_call.1} parent=43 // pred_fallthru
          _
        %s294 = sand.u32 %s24, 1
        %s295 = scalar_lea.sflag [#allocation3], %s294
        %s296 = sand.u32 %s32, 1
        %s297 = smul.addr %s296, 16
        %s298 = scalar_lea.vmem [#allocation2], %s297
        %p299 = pneg %p45
        %p300 = pneg %p42
        %p301 = pneg %p66
        %p302 = pneg %p63
        %p303 = pneg %p87
        %p304 = pneg %p84
        %s305 = sand.u32 %s24, 1
        %s306 = scalar_lea.sflag [#allocation3], %s305
        %s307 = sand.u32 %s100, 1
        %s308 = smul.addr %s307, 16
        %s309 = scalar_lea.vmem [#allocation7], %s308
        %p310 = pneg %p113
        %p311 = pneg %p110
        %p312 = pneg %p134
        %p313 = pneg %p131
        %p314 = pneg %p155
        %p315 = pneg %p152
        %p316 = pneg %p181
        %p317 = pneg %p178
        %s318 = sand.u32 %s168, 1
        %s319 = scalar_lea.sflag [#allocation4], %s318
        %s320 = sand.u32 %s168, 1
        %s321 = smul.addr %s320, 8
        %s322 = scalar_lea.vmem [#allocation8], %s321
        %s323 = smul.u32 2, %s24
        %s324 = smul.u32 2, %s24
        %s325 = smul.u32 2, %s24
        %v327 = vld [vmem:[%s276] sm:$0xff]
        %v328 = vld [vmem:[%s276 + $0x8] sm:$0xff]
        %v329 = vld [vmem:[#allocation5] sm:$0xf]
        %v330 = vld [vmem:[#allocation5 + $0x4] sm:$0xf]
        %v331 = vld [vmem:[#allocation5 + $0x8] sm:$0xf]
        %v332 = vld [vmem:[#allocation5 + $0xc] sm:$0xf]
        %v333 = vld [vmem:[#allocation5 + $0x10] sm:$0xf]
        %v334 = vld [vmem:[#allocation5 + $0x14] sm:$0xf]
        %v335 = vld [vmem:[#allocation5 + $0x18] sm:$0xf]
        %v336 = vld [vmem:[#allocation5 + $0x1c] sm:$0xf]
        %v337 = vld [vmem:[#allocation5 + $0x20] sm:$0xf]
        %v338 = vld [vmem:[#allocation5 + $0x24] sm:$0xf]
        %v339 = vld [vmem:[#allocation5 + $0x28] sm:$0xf]
        %v340 = vld [vmem:[#allocation5 + $0x2c] sm:$0xf]
        %v341 = vld [vmem:[#allocation5 + $0x30] sm:$0xf]
        %v342 = vld [vmem:[#allocation5 + $0x34] sm:$0xf]
        %v343 = vld [vmem:[#allocation5 + $0x38] sm:$0xf]
        %v344 = vld [vmem:[#allocation5 + $0x3c] sm:$0xf]
        %v345 = vld [vmem:[#allocation5 + $0x40] sm:$0xf]
        %v346 = vld [vmem:[#allocation5 + $0x44] sm:$0xf]
        %v347 = vld [vmem:[#allocation5 + $0x48] sm:$0xf]
        %v348 = vld [vmem:[#allocation5 + $0x4c] sm:$0xf]
        %v349 = vld [vmem:[#allocation5 + $0x50] sm:$0xf]
        %v350 = vld [vmem:[#allocation5 + $0x54] sm:$0xf]
        %v351 = vld [vmem:[#allocation5 + $0x58] sm:$0xf]
        %v352 = vld [vmem:[#allocation5 + $0x5c] sm:$0xf]
        %v353 = vld [vmem:[%s2] sm:$0x1]
        %v355 = vlaneseq
        %v356 = vshrl.u32 %v355, 7
        %v357 = vsub.s32 0, %v356
        %v358 = vrot.slane %v353, %v357
        %v362 = vunpack.c.l.b16 %v327
        %v363 = vunpack.c.h.b16 %v327
        %v364 = vunpack.c.l.b16 %v328
        %v365 = vunpack.c.h.b16 %v328
        %v366 = vpack.c.b16 %v364, %v362
        %v367 = vpack.c.b16 %v365, %v363
        %v393 = vunpack.c.l.b16 %v329
        %v394 = vunpack.c.l.b16 %v330
        %v395 = vunpack.c.l.b16 %v331
        %v396 = vunpack.c.l.b16 %v332
        %v397 = vunpack.c.l.b16 %v333
        %v398 = vunpack.c.l.b16 %v334
        %v399 = vunpack.c.l.b16 %v335
        %v400 = vunpack.c.l.b16 %v336
        %v401 = vunpack.c.l.b16 %v337
        %v402 = vunpack.c.l.b16 %v338
        %v403 = vunpack.c.l.b16 %v339
        %v404 = vunpack.c.l.b16 %v340
        %v405 = vunpack.c.l.b16 %v341
        %v406 = vunpack.c.l.b16 %v342
        %v407 = vunpack.c.l.b16 %v343
        %v408 = vunpack.c.l.b16 %v344
        %v409 = vunpack.c.l.b16 %v345
        %v410 = vunpack.c.l.b16 %v346
        %v411 = vunpack.c.l.b16 %v347
        %v412 = vunpack.c.l.b16 %v348
        %v413 = vunpack.c.l.b16 %v349
        %v414 = vunpack.c.l.b16 %v350
        %v415 = vunpack.c.l.b16 %v351
        %v416 = vunpack.c.l.b16 %v352
        %v417 = vpack.c.b16 %v394, %v393
        %v418 = vpack.c.b16 %v396, %v395
        %v419 = vpack.c.b16 %v398, %v397
        %v420 = vpack.c.b16 %v400, %v399
        %v421 = vpack.c.b16 %v402, %v401
        %v422 = vpack.c.b16 %v404, %v403
        %v423 = vpack.c.b16 %v406, %v405
        %v424 = vpack.c.b16 %v408, %v407
        %v425 = vpack.c.b16 %v410, %v409
        %v426 = vpack.c.b16 %v412, %v411
        %v427 = vpack.c.b16 %v414, %v413
        %v428 = vpack.c.b16 %v416, %v415
        %vm441 = vcmask 523264
        %v443 = vsel %vm441, %v367, 0
        %445 = vmatprep.subr.bf16.mxu0 0
        %446 = vmatpush1.bf16.msra.mxu0 %v417
        %447 = vmatprep.subr.bf16.mxu0 0
        %448 = vmatpush1.bf16.msra.mxu0 %v418
        %449 = vmatprep.subr.bf16.mxu0 0
        %450 = vmatpush1.bf16.msra.mxu0 %v419
        %451 = vmatprep.subr.bf16.mxu0 0
        %452 = vmatpush1.bf16.msra.mxu0 %v420
        %453 = vmatprep.subr.bf16.mxu0 0
        %454 = vmatpush1.bf16.msra.mxu0 %v421
        %455 = vmatprep.subr.bf16.mxu0 0
        %456 = vmatpush1.bf16.msra.mxu0 %v422
        %457 = vmatprep.subr.bf16.mxu0 0
        %458 = vmatpush1.bf16.msra.mxu0 %v423
        %459 = vmatprep.subr.bf16.mxu0 0
        %460 = vmatpush1.bf16.msra.mxu0 %v424
        %461 = vmatprep.subr.bf16.mxu0 0
        %462 = vmatpush1.bf16.msra.mxu0 %v425
        %463 = vmatprep.subr.bf16.mxu0 0
        %464 = vmatpush1.bf16.msra.mxu0 %v426
        %465 = vmatprep.subr.bf16.mxu0 0
        %466 = vmatpush1.bf16.msra.mxu0 %v427
        %467 = vmatprep.subr.bf16.mxu0 0
        %468 = vmatpush1.bf16.msra.mxu0 %v428
        %469 = vmatprep.subr.bf16.mxu0 0
        %470 = vmatpush1.bf16.msra.mxu0 0
        %471 = vmatprep.subr.bf16.mxu0 0
        %472 = vmatpush1.bf16.msra.mxu0 0
        %473 = vmatprep.subr.bf16.mxu0 0
        %474 = vmatpush1.bf16.msra.mxu0 0
        %475 = vmatprep.subr.bf16.mxu0 0
        %476 = vmatpush1.bf16.msra.mxu0 0
        %477 = vmatprep.mubr.bf16.mxu0 %v443
        %478 = vmatmul.mubr.bf16.gmra.mrb[0].mxu0 %v366
        %v479 = vpop.f32.mrb[0].mxu0
        %v480 = vadd.f32 %v358, %v479
        %v481 = vpop.f32.mrb[0].mxu0
        %v482 = vpop.f32.mrb[0].mxu0
        %v483 = vadd.f32 %v358, %v482
        %v484 = vpop.f32.mrb[0].mxu0
        %485 = vdwg.mxu0
        %v486 = vld [vmem:[%s289] sm:$0xff]
        %v487 = vld [vmem:[%s289 + $0x8] sm:$0xff]
        %v488 = vadd.f32 %v480, %v486
        %v489 = vadd.f32 %v483, %v487
        %490 = vadd.xlane.f32.xlu0 %v488
        %v491 = vpop.xlane.xlu0 %490
        %492 = vadd.xlane.f32.xlu0 %v489
        %v493 = vpop.xlane.xlu0 %492
        %v494 = vrcp.pop 128.0
        %v495 = vmul.f32 %v491, %v494
        %v496 = vmul.f32 %v493, %v494
        %v497 = vsub.f32 %v488, %v495
        %v498 = vsub.f32 %v489, %v496
        %v499 = vmul.f32 %v497, %v497
        %v500 = vmul.f32 %v498, %v498
        %501 = vadd.xlane.f32.xlu0 %v499
        %v502 = vpop.xlane.xlu0 %501
        %503 = vadd.xlane.f32.xlu0 %v500
        %v504 = vpop.xlane.xlu0 %503
        %v505 = vmul.f32 %v502, %v494
        %v506 = vmul.f32 %v504, %v494
        %v507 = vadd.f32 %v505, 1e-05
        %v508 = vadd.f32 %v506, 1e-05
        %v509 = vrsqrt.pop %v507
        %v510 = vrsqrt.pop %v508
        %v511 = vmul.f32 %v497, %v509
        %v512 = vmul.f32 %v498, %v510
        %v513 = vld [vmem:[%s4] sm:$0x1]
        %v515 = vlaneseq
        %v516 = vshrl.u32 %v515, 7
        %v517 = vsub.s32 0, %v516
        %v518 = vrot.slane %v513, %v517
        %v520 = vmul.f32 %v511, %v518
        %v521 = vmul.f32 %v512, %v518
        %v522 = vld [vmem:[%s5] sm:$0x1]
        %v524 = vlaneseq
        %v525 = vshrl.u32 %v524, 7
        %v526 = vsub.s32 0, %v525
        %v527 = vrot.slane %v522, %v526
        %v529 = vadd.f32 %v520, %v527
        %v530 = vadd.f32 %v521, %v527
        %v531 = vpack.c.bf16 %v530, %v529
        %v533 = vunpack.c.l.b16 %v531
        %v534 = vunpack.c.h.b16 %v531
        %v535 = vpack.c.b16 %v533, %v533
        %v536 = vpack.c.b16 %v534, %v534
        %539 = vst [vmem:[%s322] sm:$0xf] %v535
        %540 = vst [vmem:[%s322 + $0x4] sm:$0xf] %v536
        %s541 = sand.u32 %s168, 1
        %s542 = scalar_lea.sflag [#allocation4], %s541
        %s543 = sand.u32 %s168, 1
        %s544 = smul.addr %s543, 8
        %s545 = scalar_lea.vmem [#allocation8], %s544
        // Predicated region
        $region57: #{tpu_custom_call.1} parent=43 // pred_check
          %p546 = pneg %p178
        $region58: #{tpu_custom_call.1} parent=43 // pred_check_branch
          %548 = sbr.rel (%p546) target = $region60
        $region59: #{tpu_custom_call.1} parent=43 // pred_region
          %s549 = smul.u32 2, %s24
          %s551 = ssub.s32 128, 128
          %552 = vsyncadd %s542, %s551
          %s553 = smul.addr %s549, 64
          %s554 = scalar_lea.hbm %s6, %s553
          %s555 = sshll.u32 %s545, 4
          %s556 = int_to_ptr.vmem [resolvable:$true] %s555
          %561 = dma.vmem_to_hbm [thread:$0]  %s556, 128, %s554, %s542, 64, 64, 4
        $region60: #{tpu_custom_call.1} parent=43 // pred_fallthru
          _
      $region44: #{tpu_custom_call.1} parent=5 // pred_fallthru
        _
      %p562 = scmp.le.s32.totalorder 2, %s19
      // Predicated region
      $region61: #{tpu_custom_call.1} parent=5 // pred_check
        %p563 = pneg %p562
      $region62: #{tpu_custom_call.1} parent=5 // pred_check_branch
        %565 = sbr.rel (%p563) target = $region64
      $region63: #{tpu_custom_call.1} parent=5 // pred_region
        %s566 = ssub.s32 %s19, 2
        // Predicated region
        $region65: #{tpu_custom_call.1} parent=63 // pred_check
          %p567 = pneg %p184
        $region66: #{tpu_custom_call.1} parent=63 // pred_check_branch
          %569 = sbr.rel (%p567) target = $region68
        $region67: #{tpu_custom_call.1} parent=63 // pred_region
          %s570 = sand.u32 %s169, 1
          %s571 = scalar_lea.sflag [#allocation4], %s570
          %s572 = sand.u32 %s169, 1
          %s573 = smul.addr %s572, 8
          %s574 = scalar_lea.vmem [#allocation8], %s573
          %575 = dma.done %s571, 128
        $region68: #{tpu_custom_call.1} parent=63 // pred_fallthru
          _
      $region64: #{tpu_custom_call.1} parent=5 // pred_fallthru
        _
    $region6: #{tpu_custom_call.1} parent=1 // loop_footer
      %s23 = sadd.s32 1, %s19
    $region7: #{tpu_custom_call.1} parent=1 // loop_footer_branch
      %18 = sbr.rel target = $region3
    $region8: #{tpu_custom_call.1} parent=1 // loop_exit
      _
    %576 = vsyncpa [#allocation3], 1
    %s577 = scalar_lea.sflag [#allocation3], 1
    %578 = vsyncpa %s577, 1
    %579 = vsyncpa [#allocation6], 1
    %580 = vsyncpa [#allocation4], 1
    %s581 = scalar_lea.sflag [#allocation4], 1
    %582 = vsyncpa %s581, 1

</llo_original>
